<compile_context>
chip_gen: v6e
topology: v6e:2x2x1
jax: 0.10.0
libtpu: 0.0.40
codegen_flags: <defaults>
</compile_context>

<pallas_src>
import jax
import jax.numpy as jnp
from jax.experimental import pallas as pl
from jax.experimental.pallas import tpu as pltpu

_LANE = 128
_MAX_LANE_TILE_2D = 1024        # lane-axis tile cap, multiple of 128
_MAX_ROW_TILE_2D = 512          # sublane-axis tile cap, multiple of 8
_MAX_LANE_TILE_4D = 2048        # spatial tile cap, multiple of 128
_MAX_ROW_TILE_4D = 256          # (n, c)-row tile cap, multiple of 8
_PALLAS_MIN_BYTES = 256 * 1024  # below this a fused XLA add wins
_VMEM_LIMIT_BYTES = 32 * 1024 * 1024


def _bias_add_kernel(x_ref, b_ref, o_ref):
    # b_ref is either (1, TS) (row bias, broadcast over sublanes) or (TR, 1)
    # (per-row bias, broadcast over lanes); jnp broadcasting covers both.
    o_ref[...] = x_ref[...] + b_ref[...]


def _row_tile(dim, cap):
    return dim if dim <= cap else cap   # cap is a multiple of 8


def _lane_tile(dim, cap):
    return dim if dim <= cap else cap   # cap is a multiple of 128


def _compiler_params():
    return pltpu.CompilerParams(
        dimension_semantics=("parallel", "parallel"),
        vmem_limit_bytes=_VMEM_LIMIT_BYTES,
    )


def _bias_add_rowwise(x2d, b_row, tr, ts):
    """x2d: (R, S); b_row: (1, S) shared by every row tile."""
    R, S = x2d.shape
    return pl.pallas_call(
        _bias_add_kernel,
        out_shape=jax.ShapeDtypeStruct((R, S), x2d.dtype),
        grid=(pl.cdiv(R, tr), pl.cdiv(S, ts)),
        in_specs=[
            pl.BlockSpec((tr, ts), lambda i, j: (i, j)),
            pl.BlockSpec((1, ts), lambda i, j: (0, j)),
        ],
        out_specs=pl.BlockSpec((tr, ts), lambda i, j: (i, j)),
        compiler_params=_compiler_params(),
    )(x2d, b_row)


def _bias_add_colwise(x2d, b_col, tr, ts):
    """x2d: (R, S); b_col: (R, 1) per-row bias."""
    R, S = x2d.shape
    return pl.pallas_call(
        _bias_add_kernel,
        out_shape=jax.ShapeDtypeStruct((R, S), x2d.dtype),
        grid=(pl.cdiv(R, tr), pl.cdiv(S, ts)),
        in_specs=[
            pl.BlockSpec((tr, ts), lambda i, j: (i, j)),
            pl.BlockSpec((tr, 1), lambda i, j: (i, 0)),
        ],
        out_specs=pl.BlockSpec((tr, ts), lambda i, j: (i, j)),
        compiler_params=_compiler_params(),
    )(x2d, b_col)


def _lane_pack_width(total, C):
    """Largest W <= 1024 that is a multiple of 128 and of C and divides total,
    so a small-C (N, C) tensor can be viewed lane-dense as (total // W, W)."""
    best = None
    w = _LANE
    while w <= _MAX_LANE_TILE_2D:
        if w % C == 0 and total % w == 0:
            best = w
        w += _LANE
    return best


def _add_bias_2d(x, bias, out_dtype):
    N, C = x.shape
    xc = x.astype(out_dtype)
    bc = bias.astype(out_dtype)

    if C < _LANE:
        w = _lane_pack_width(N * C, C)
        if w is not None:
            # Lane-dense repack: (N, C) -> (N*C // w, w); bias repeats every C lanes.
            xr = xc.reshape(N * C // w, w)
            b_row = jnp.tile(bc, w // C).reshape(1, w)
            tr = _row_tile(xr.shape[0], _MAX_ROW_TILE_2D)
            out = _bias_add_rowwise(xr, b_row, tr, w)
            return out.reshape(N, C)

    tr = _row_tile(N, _MAX_ROW_TILE_2D)
    ts = _lane_tile(C, _MAX_LANE_TILE_2D)
    return _bias_add_rowwise(xc, bc.reshape(1, C), tr, ts)


def _add_bias_4d(x, bias, out_dtype):
    N, C, H, W = x.shape
    R, S = N * C, H * W
    # Sublane- and lane-dense layout: one row per (n, c) pair, per-row bias column.
    xr = x.astype(out_dtype).reshape(R, S)
    b_col = jnp.tile(bias.astype(out_dtype), N).reshape(R, 1)
    tr = _row_tile(R, _MAX_ROW_TILE_4D)
    ts = _lane_tile(S, _MAX_LANE_TILE_4D)
    out = _bias_add_colwise(xr, b_col, tr, ts)
    return out.reshape(N, C, H, W)


def add_bias(x, bias, *, force_pallas=False):
    """Replicates AddBias.forward. `bias` may be (C,) or (C, 1) (the module's
    stored parameter shape)."""
    if x.ndim not in (2, 4):
        raise ValueError("AddBias expects a 2D or 4D input")
    b = jnp.asarray(bias).reshape(-1)
    C = x.shape[1]
    if b.shape[0] != C:
        raise ValueError("bias length must match x.shape[1]")

    # Match torch type promotion (e.g. bf16 x + f32 bias -> f32 output).
    out_dtype = jnp.result_type(x.dtype, b.dtype)

    nbytes = x.size * jnp.dtype(out_dtype).itemsize
    if not force_pallas and nbytes < _PALLAS_MIN_BYTES:
        # Tiny tensors: custom-call + per-step overhead dominates; let XLA fuse.
        shape = (1, C) if x.ndim == 2 else (1, C, 1, 1)
        return x.astype(out_dtype) + b.astype(out_dtype).reshape(shape)

    if x.ndim == 2:
        return _add_bias_2d(x, b, out_dtype)
    return _add_bias_4d(x, b, out_dtype)


if __name__ == "__main__":
    key = jax.random.PRNGKey(0)
    k_bias, k_x2, k_x4, k_x2b, k_x2c, k_x4b = jax.random.split(key, 6)

    C = 4
    # The module stores its parameter as (C, 1); pass it in that shape.
    bias = jax.random.normal(k_bias, (C, 1), dtype=jnp.float32)
    b_vec = bias.reshape(-1)

    # --- module-consistent small shapes (force the Pallas path) -------------
    x2 = jax.random.normal(k_x2, (2, C), dtype=jnp.float32)
    out2 = jax.block_until_ready(add_bias(x2, bias, force_pallas=True))
    ref2 = x2 + b_vec.reshape(1, C)
    assert out2.shape == x2.shape and out2.dtype == x2.dtype
    assert jnp.allclose(out2, ref2, atol=1e-6)

    x4 = jax.random.normal(k_x4, (2, C, 16, 16), dtype=jnp.float32)
    out4 = jax.block_until_ready(add_bias(x4, bias, force_pallas=True))
    ref4 = x4 + b_vec.reshape(1, C, 1, 1)
    assert out4.shape == x4.shape and out4.dtype == x4.dtype
    assert jnp.allclose(out4, ref4, atol=1e-6)

    # --- lane-packed small-C 2D path (N*C divisible by 128) -----------------
    x2b = jax.random.normal(k_x2b, (96, C), dtype=jnp.float32)
    out2b = jax.block_until_ready(add_bias(x2b, bias, force_pallas=True))
    assert jnp.allclose(out2b, x2b + b_vec.reshape(1, C), atol=1e-6)

    # --- multi-tile 2D path with edge blocks (520 > 512 rows, 1152 > 1024 lanes)
    C2 = 1152
    bias2 = jax.random.normal(k_bias, (C2,), dtype=jnp.float32)
    x2c = jax.random.normal(k_x2c, (520, C2), dtype=jnp.float32)
    out2c = jax.block_until_ready(add_bias(x2c, bias2))
    assert jnp.allclose(out2c, x2c + bias2.reshape(1, C2), atol=1e-6)

    # --- multi-tile 4D path with edge blocks (320 > 256 rows, 2304 > 2048 lanes)
    C3 = 160
    bias3 = jax.random.normal(k_bias, (C3,), dtype=jnp.float32)
    x4b = jax.random.normal(k_x4b, (2, C3, 48, 48), dtype=jnp.float32)
    out4b = jax.block_until_ready(add_bias(x4b, bias3))
    assert jnp.allclose(out4b, x4b + bias3.reshape(1, C3, 1, 1), atol=1e-6)

    # --- mixed-dtype promotion (bf16 x + f32 bias -> f32 output, like torch) -
    x4h = x4.astype(jnp.bfloat16)
    out4h = jax.block_until_ready(add_bias(x4h, bias, force_pallas=True))
    ref4h = x4h.astype(jnp.float32) + b_vec.reshape(1, C, 1, 1)
    assert out4h.dtype == jnp.float32
    assert jnp.allclose(out4h, ref4h, atol=1e-6)

    print("KERNEL_OK")
</pallas_src>

<mosaic_0001>
module attributes {stable_mosaic.version = 11 : i64} {
  func.func @_bias_add_kernel(%arg0: i32, %arg1: i32, %arg2: memref<2x4xf32, #tpu.memory_space<vmem>>, %arg3: memref<1x4xf32, #tpu.memory_space<vmem>>, %arg4: memref<2x4xf32, #tpu.memory_space<vmem>>) attributes {dimension_semantics = [#tpu.dimension_semantics<parallel>, #tpu.dimension_semantics<parallel>], iteration_bounds = array<i64: 1, 1>, scalar_prefetch = 0 : i64, scratch_operands = 0 : i64, tpu.core_type = #tpu.core_type<tc>, window_params = [{transform_indices = @transform_0, window_bounds = array<i64: 2, 4>}, {transform_indices = @transform_1, window_bounds = array<i64: 1, 4>}, {transform_indices = @transform_2, window_bounds = array<i64: 2, 4>}]} {
    %c0 = arith.constant 0 : index
    %c0_0 = arith.constant 0 : index
    %0 = vector.load %arg2[%c0, %c0_0] : memref<2x4xf32, #tpu.memory_space<vmem>>, vector<2x4xf32>
    %c0_1 = arith.constant 0 : index
    %c0_2 = arith.constant 0 : index
    %1 = vector.load %arg3[%c0_1, %c0_2] : memref<1x4xf32, #tpu.memory_space<vmem>>, vector<1x4xf32>
    %2 = vector.broadcast %1 : vector<1x4xf32> to vector<2x4xf32>
    %3 = arith.addf %0, %2 : vector<2x4xf32>
    %c0_3 = arith.constant 0 : index
    %c0_4 = arith.constant 0 : index
    %4 = vector.load %arg4[%c0_3, %c0_4] : memref<2x4xf32, #tpu.memory_space<vmem>>, vector<2x4xf32>
    tpu.vector_store %arg4[%c0_3, %c0_4], %3 {strides = array<i32>} : memref<2x4xf32, #tpu.memory_space<vmem>>, vector<2x4xf32>,
    return
  }
  func.func @transform_0(%arg0: i32, %arg1: i32) -> (i32, i32) {
    %c0_i32 = arith.constant 0 : i32
    return %arg0, %arg1 : i32, i32
  }
  func.func @transform_1(%arg0: i32, %arg1: i32) -> (i32, i32) {
    %c0_i32 = arith.constant 0 : i32
    %c0_i32_0 = arith.constant 0 : i32
    return %c0_i32, %arg1 : i32, i32
  }
  func.func @transform_2(%arg0: i32, %arg1: i32) -> (i32, i32) {
    %c0_i32 = arith.constant 0 : i32
    return %arg0, %arg1 : i32, i32
  }
}

</mosaic_0001>

<llo_original>
// kernel: tpu_custom_call.1
$region0: #{tpu_custom_call.1}
  #allocation0 [shape = 'u32[]', space=smem, size = 0x4, offset = 0x4, fixed_abs, tag = 'smem constant byte address 0x4 - core index']
  #allocation1 [shape = 'u32[144,128]{1,0:T(1,128)}', space=vmem, size = 0x12000, scoped, tag = 'internal scratch']
  %s0 = inlined_call_operand.hbm [shape: f32[2,4], index: 0, kind: input, shape index: {}]
  %s1 = inlined_call_operand.vmem [shape: f32[1,4], index: 1, kind: input, shape index: {}]
  %s2 = inlined_call_operand.hbm [shape: f32[2,4], index: 2, kind: output, shape index: {}]
  %s3 = sld [smem:[#allocation0]]
  $region22: #{tpu_custom_call.1} parent=0
    _
  %s5 = ssub.s32 1, %s3
  %s6 = scalar_select 0, %s5, %s3
  $region1: #{tpu_custom_call.1} parent=0
    #allocation2 [shape = 'u8[1024]{0}', space=vmem, size = 0x400, scoped, tag = 'input window, operand 0, single buffered']
    #allocation3 [shape = 's32[1]{0}', space=sflag, size = 0x4, scoped, tag = 'scoped memory for tpu_custom_call.1']
    #allocation4 [shape = 's32[1]{0}', space=sflag, size = 0x4, scoped, tag = 'scoped memory for tpu_custom_call.1']
    #allocation5 [shape = 'u8[1024]{0}', space=vmem, size = 0x400, scoped, tag = 'output window, operand 0, single buffered']
    %7 = vsyncpa [#allocation3], 0
    %8 = vsyncpa [#allocation4], 0
    // Predicated region
    $region2: #{tpu_custom_call.1} parent=1 // pred_check
      _
    $region3: #{tpu_custom_call.1} parent=1 // pred_check_branch
      %10 = sbr.rel (0) target = $region5
    $region4: #{tpu_custom_call.1} parent=1 // pred_region
      %s12 = ssub.s32 32, 32
      %13 = vsyncadd [#allocation3], %s12
      %s15 = sshll.u32 [#allocation2], 4
      %s16 = int_to_ptr.vmem [resolvable:$true] %s15
      %18 = dma.hbm_to_vmem [thread:$0]  %s0, 32, %s16, [#allocation3]
    $region5: #{tpu_custom_call.1} parent=1 // pred_fallthru
      _
    // Predicated region
    $region6: #{tpu_custom_call.1} parent=1 // pred_check
      _
    $region7: #{tpu_custom_call.1} parent=1 // pred_check_branch
      %20 = sbr.rel (0) target = $region9
    $region8: #{tpu_custom_call.1} parent=1 // pred_region
      _
    $region9: #{tpu_custom_call.1} parent=1 // pred_fallthru
      _
    // Predicated region
    $region10: #{tpu_custom_call.1} parent=1 // pred_check
      _
    $region11: #{tpu_custom_call.1} parent=1 // pred_check_branch
      %22 = sbr.rel (0) target = $region13
    $region12: #{tpu_custom_call.1} parent=1 // pred_region
      %23 = dma.done [#allocation3], 32
    $region13: #{tpu_custom_call.1} parent=1 // pred_fallthru
      _
    %v24 = vld [vmem:[#allocation2] sm:$0x3]
    %v25 = vld [vmem:[%s1] sm:$0x1]
    %v27 = vlaneseq
    %v28 = vshrl.u32 %v27, 7
    %v29 = vsub.s32 0, %v28
    %v30 = vrot.slane %v25, %v29
    %v32 = vadd.f32 %v24, %v30
    %vm33 = vcmask 25600
    %34 = vst.msk [vmem:[#allocation5] sm:$0x3] %vm33, %v32
    // Predicated region
    $region14: #{tpu_custom_call.1} parent=1 // pred_check
      _
    $region15: #{tpu_custom_call.1} parent=1 // pred_check_branch
      %36 = sbr.rel (0) target = $region17
    $region16: #{tpu_custom_call.1} parent=1 // pred_region
      %s38 = ssub.s32 32, 32
      %39 = vsyncadd [#allocation4], %s38
      %s41 = sshll.u32 [#allocation5], 4
      %s42 = int_to_ptr.vmem [resolvable:$true] %s41
      %44 = dma.vmem_to_hbm [thread:$0]  %s42, 32, %s2, [#allocation4]
    $region17: #{tpu_custom_call.1} parent=1 // pred_fallthru
      _
    // Predicated region
    $region18: #{tpu_custom_call.1} parent=1 // pred_check
      _
    $region19: #{tpu_custom_call.1} parent=1 // pred_check_branch
      %46 = sbr.rel (0) target = $region21
    $region20: #{tpu_custom_call.1} parent=1 // pred_region
      %47 = dma.done [#allocation4], 32
    $region21: #{tpu_custom_call.1} parent=1 // pred_fallthru
      _
    %48 = vsyncpa [#allocation3], 1
    %49 = vsyncpa [#allocation4], 1

</llo_original>
